<compile_context>
chip_gen: v7x
topology: tpu7x:2x2x1
jax: 0.10.0
libtpu: 0.0.40
codegen_flags: <defaults>
</compile_context>

<pallas_src>
import math

import jax
import jax.numpy as jnp
from jax import lax
from jax.experimental import pallas as pl
from jax.experimental.pallas import tpu as pltpu

F32 = jnp.float32


# =====================  Pallas kernel  =====================

def _ffn_kernel(x_ref, w_ref, b_ref, o_ref):
    """Fused per-row FFN: y = x + W2^T(relu(W1^T x + b1)) + b2.

    x_ref: (TM, H) row tile
    w_ref: (2H, H) packed [W1 ; W2] (each in (in, out) layout)
    b_ref: (2, H)  packed [b1 ; b2]
    """
    h = x_ref.shape[-1]
    x = x_ref[...]

    w1 = w_ref[0:h, :]          # static sublane slice (multiple of 8)
    w2 = w_ref[h:2 * h, :]
    b1 = b_ref[0:1, :]
    b2 = b_ref[1:2, :]

    t = jnp.dot(x, w1, preferred_element_type=jnp.float32) + b1
    t = jnp.maximum(t, 0.0)                       # ReLU (dropout = identity)
    y = jnp.dot(t, w2, preferred_element_type=jnp.float32) + b2
    o_ref[...] = x + y                            # residual


def ffn_forward(x, w_pack, b_pack, *, block_m=512):
    """x: (B, T, H) float32 -> (B, T, H). One fused pallas_call."""
    b, t, h = x.shape
    m = b * t
    x2 = x.reshape(m, h).astype(F32)

    tm = m if m <= block_m else block_m
    assert m % tm == 0, "row count must divide block_m (pad rows otherwise)"
    grid = (m // tm,)

    out = pl.pallas_call(
        _ffn_kernel,
        out_shape=jax.ShapeDtypeStruct((m, h), F32),
        grid_spec=pltpu.PrefetchScalarGridSpec(
            num_scalar_prefetch=0,
            grid=grid,
            in_specs=[
                pl.BlockSpec((tm, h), lambda i: (i, 0)),        # row tile
                pl.BlockSpec((2 * h, h), lambda i: (0, 0)),     # packed weights
                pl.BlockSpec((2, h), lambda i: (0, 0)),         # packed biases
            ],
            out_specs=pl.BlockSpec((tm, h), lambda i: (i, 0)),
        ),
        compiler_params=pltpu.CompilerParams(
            dimension_semantics=("parallel",)),                  # dual-TC on v7x if grid > 1
    )(x2, w_pack, b_pack)
    return out.reshape(b, t, h)


# =====================  params (torch Conv1d-like init)  =====================

def init_ffn_params(key, hidden):
    """Conv1d(H, H, k=1) default init: U(-1/sqrt(H), 1/sqrt(H)) for weight and bias.
    Weights stored in (in, out) layout (== conv weight[:, :, 0].T) and pre-packed
    once into the slabs the kernel consumes (perf feedback: no per-forward packing)."""
    k1, k2, k3, k4 = jax.random.split(key, 4)
    bound = 1.0 / math.sqrt(hidden)
    w1 = jax.random.uniform(k1, (hidden, hidden), F32, -bound, bound)
    b1 = jax.random.uniform(k2, (hidden,), F32, -bound, bound)
    w2 = jax.random.uniform(k3, (hidden, hidden), F32, -bound, bound)
    b2 = jax.random.uniform(k4, (hidden,), F32, -bound, bound)

    w_pack = jnp.concatenate([w1, w2], axis=0)        # (2H, H)
    b_pack = jnp.stack([b1, b2], axis=0)              # (2, H)
    return w_pack, b_pack, (w1, b1, w2, b2)


def ffn_reference(x, w1, b1, w2, b2):
    """Pure-JAX reference (eval-mode dropout = identity)."""
    h = jnp.maximum(
        jnp.dot(x, w1, precision=lax.Precision.HIGHEST) + b1, 0.0)
    return x + jnp.dot(h, w2, precision=lax.Precision.HIGHEST) + b2


# =====================  main  =====================

if __name__ == "__main__":
    B, T, H = 2, 8, 32          # batch, seq (time), hidden_units

    key = jax.random.PRNGKey(0)
    pkey, xkey = jax.random.split(key)
    w_pack, b_pack, (w1, b1, w2, b2) = init_ffn_params(pkey, H)
    x = jax.random.normal(xkey, (B, T, H), F32)

    out = jax.jit(ffn_forward)(x, w_pack, b_pack)
    out = jax.block_until_ready(out)

    ref = ffn_reference(x, w1, b1, w2, b2)
    assert bool(jnp.all(jnp.isfinite(out))), "non-finite output"
    err = float(jnp.max(jnp.abs(out - ref)))
    assert err < 1e-2, f"mismatch vs reference: max|diff|={err}"
    print("KERNEL_OK")
</pallas_src>

<mosaic_0001>
module attributes {stable_mosaic.version = 11 : i64} {
  func.func @_ffn_kernel(%arg0: i32, %arg1: memref<16x32xf32, #tpu.memory_space<vmem>>, %arg2: memref<64x32xf32, #tpu.memory_space<vmem>>, %arg3: memref<2x32xf32, #tpu.memory_space<vmem>>, %arg4: memref<16x32xf32, #tpu.memory_space<vmem>>) attributes {dimension_semantics = [#tpu.dimension_semantics<parallel>], iteration_bounds = array<i64: 1>, scalar_prefetch = 0 : i64, scratch_operands = 0 : i64, tpu.core_type = #tpu.core_type<tc>, window_params = [{transform_indices = @transform_0, window_bounds = array<i64: 16, 32>}, {pipeline_mode = #tpu.pipeline_mode<synchronous>, transform_indices = @transform_1, window_bounds = array<i64: 64, 32>}, {pipeline_mode = #tpu.pipeline_mode<synchronous>, transform_indices = @transform_2, window_bounds = array<i64: 2, 32>}, {transform_indices = @transform_3, window_bounds = array<i64: 16, 32>}]} {
    %c0 = arith.constant 0 : index
    %c0_0 = arith.constant 0 : index
    %0 = vector.load %arg1[%c0, %c0_0] : memref<16x32xf32, #tpu.memory_space<vmem>>, vector<16x32xf32>
    %c0_1 = arith.constant 0 : index
    %c0_2 = arith.constant 0 : index
    %1 = vector.load %arg2[%c0_1, %c0_2] : memref<64x32xf32, #tpu.memory_space<vmem>>, vector<32x32xf32>
    %c32 = arith.constant 32 : index
    %c0_3 = arith.constant 0 : index
    %2 = vector.load %arg2[%c32, %c0_3] : memref<64x32xf32, #tpu.memory_space<vmem>>, vector<32x32xf32>
    %c0_4 = arith.constant 0 : index
    %c0_5 = arith.constant 0 : index
    %3 = vector.load %arg3[%c0_4, %c0_5] : memref<2x32xf32, #tpu.memory_space<vmem>>, vector<1x32xf32>
    %c1 = arith.constant 1 : index
    %c0_6 = arith.constant 0 : index
    %4 = vector.load %arg3[%c1, %c0_6] : memref<2x32xf32, #tpu.memory_space<vmem>>, vector<1x32xf32>
    %cst = arith.constant dense<0.000000e+00> : vector<16x32xf32>
    %5 = tpu.matmul %0, %1, %cst {dimension_numbers = #tpu.dot_dimension_numbers<[1], [0], [0], [1], [0, 0, 1, 1], [], []>} : vector<16x32xf32>, vector<32x32xf32>, vector<16x32xf32> -> vector<16x32xf32>
    %6 = vector.broadcast %3 : vector<1x32xf32> to vector<16x32xf32>
    %7 = arith.addf %5, %6 : vector<16x32xf32>
    %cst_7 = arith.constant 0.000000e+00 : f32
    %8 = vector.broadcast %cst_7 : f32 to vector<16x32xf32>
    %9 = arith.maximumf %7, %8 : vector<16x32xf32>
    %cst_8 = arith.constant dense<0.000000e+00> : vector<16x32xf32>
    %10 = tpu.matmul %9, %2, %cst_8 {dimension_numbers = #tpu.dot_dimension_numbers<[1], [0], [0], [1], [0, 0, 1, 1], [], []>} : vector<16x32xf32>, vector<32x32xf32>, vector<16x32xf32> -> vector<16x32xf32>
    %11 = vector.broadcast %4 : vector<1x32xf32> to vector<16x32xf32>
    %12 = arith.addf %10, %11 : vector<16x32xf32>
    %13 = arith.addf %0, %12 : vector<16x32xf32>
    %c0_9 = arith.constant 0 : index
    %c0_10 = arith.constant 0 : index
    %14 = vector.load %arg4[%c0_9, %c0_10] : memref<16x32xf32, #tpu.memory_space<vmem>>, vector<16x32xf32>
    tpu.vector_store %arg4[%c0_9, %c0_10], %13 {strides = array<i32>} : memref<16x32xf32, #tpu.memory_space<vmem>>, vector<16x32xf32>,
    return
  }
  func.func @transform_0(%arg0: i32) -> (i32, i32) {
    %c0_i32 = arith.constant 0 : i32
    %c0_i32_0 = arith.constant 0 : i32
    return %arg0, %c0_i32 : i32, i32
  }
  func.func @transform_1(%arg0: i32) -> (i32, i32) {
    %c0_i32 = arith.constant 0 : i32
    %c0_i32_0 = arith.constant 0 : i32
    %c0_i32_1 = arith.constant 0 : i32
    return %c0_i32, %c0_i32_0 : i32, i32
  }
  func.func @transform_2(%arg0: i32) -> (i32, i32) {
    %c0_i32 = arith.constant 0 : i32
    %c0_i32_0 = arith.constant 0 : i32
    %c0_i32_1 = arith.constant 0 : i32
    return %c0_i32, %c0_i32_0 : i32, i32
  }
  func.func @transform_3(%arg0: i32) -> (i32, i32) {
    %c0_i32 = arith.constant 0 : i32
    %c0_i32_0 = arith.constant 0 : i32
    return %arg0, %c0_i32 : i32, i32
  }
}

</mosaic_0001>

<llo_original>
// kernel: ffn_forward.1
$region0: #{ffn_forward.1}
  #allocation0 [shape = 'u32[]', space=smem, size = 0x4, offset = 0x4, fixed_abs, tag = 'smem constant byte address 0x4 - core index']
  #allocation1 [shape = 'u32[144,128]{1,0:T(1,128)}', space=vmem, size = 0x12000, scoped, tag = 'internal scratch']
  %s0 = inlined_call_operand.vmem [shape: f32[16,32], index: 0, kind: input, shape index: {}]
  %s1 = inlined_call_operand.vmem [shape: f32[64,32], index: 1, kind: input, shape index: {}]
  %s2 = inlined_call_operand.vmem [shape: f32[2,32], index: 2, kind: input, shape index: {}]
  %s3 = inlined_call_operand.hbm [shape: f32[16,32], index: 3, kind: output, shape index: {}]
  %s4 = sld [smem:[#allocation0]]
  $region22: #{ffn_forward.1} parent=0
    _
  %s6 = ssub.s32 1, %s4
  %s7 = scalar_select 0, %s6, %s4
  $region1: #{ffn_forward.1} parent=0
    #allocation2 [shape = 'u8[8192]{0}', space=vmem, size = 0x2000, scoped, tag = 'output window, operand 0, single buffered']
    #allocation3 [shape = 's32[1]{0}', space=sflag, size = 0x4, scoped, tag = 'scoped memory for ffn_forward.1']
    %8 = vsyncpa [#allocation3], 0
    // Predicated region
    $region2: #{ffn_forward.1} parent=1 // pred_check
      _
    $region3: #{ffn_forward.1} parent=1 // pred_check_branch
      %10 = sbr.rel (0) target = $region5
    $region4: #{ffn_forward.1} parent=1 // pred_region
      _
    $region5: #{ffn_forward.1} parent=1 // pred_fallthru
      _
    // Predicated region
    $region6: #{ffn_forward.1} parent=1 // pred_check
      _
    $region7: #{ffn_forward.1} parent=1 // pred_check_branch
      %12 = sbr.rel (0) target = $region9
    $region8: #{ffn_forward.1} parent=1 // pred_region
      _
    $region9: #{ffn_forward.1} parent=1 // pred_fallthru
      _
    // Predicated region
    $region10: #{ffn_forward.1} parent=1 // pred_check
      _
    $region11: #{ffn_forward.1} parent=1 // pred_check_branch
      %14 = sbr.rel (0) target = $region13
    $region12: #{ffn_forward.1} parent=1 // pred_region
      _
    $region13: #{ffn_forward.1} parent=1 // pred_fallthru
      _
    %v15 = vld [vmem:[%s0] sm:$0xff]
    %v16 = vld [vmem:[%s0 + $0x8] sm:$0xff]
    %v17 = vld [vmem:[%s1] sm:$0xff]
    %v18 = vld [vmem:[%s1 + $0x8] sm:$0xff]
    %v19 = vld [vmem:[%s1 + $0x10] sm:$0xff]
    %v20 = vld [vmem:[%s1 + $0x18] sm:$0xff]
    %v21 = vld [vmem:[%s1 + $0x20] sm:$0xff]
    %v22 = vld [vmem:[%s1 + $0x28] sm:$0xff]
    %v23 = vld [vmem:[%s1 + $0x30] sm:$0xff]
    %v24 = vld [vmem:[%s1 + $0x38] sm:$0xff]
    %v25 = vld [vmem:[%s2] sm:$0x1]
    %v26 = vld [vmem:[%s2 + $0x1] sm:$0x1]
    %v27 = vlaneseq
    %v28 = vshrl.u32 %v27, 7
    %v29 = vsub.s32 0, %v28
    %v30 = vrot.slane %v25, %v29
    %vm31 = vcmask 261120
    %v33 = vsel %vm31, %v15, 0
    %v36 = vsel %vm31, %v16, 0
    %38 = vmatprep.subr.mxu0 0.0
    %39 = vmatpush1.msra.mxu0 %v17
    %40 = vmatprep.subr.mxu0 0.0
    %41 = vmatpush1.msra.mxu0 %v18
    %42 = vmatprep.subr.mxu0 0.0
    %43 = vmatpush1.msra.mxu0 %v19
    %44 = vmatprep.subr.mxu0 0.0
    %45 = vmatpush1.msra.mxu0 %v20
    %46 = vmatprep.subr.mxu0 0.0
    %47 = vmatpush1.msra.mxu0 0.0
    %48 = vmatprep.subr.mxu0 0.0
    %49 = vmatpush1.msra.mxu0 0.0
    %50 = vmatprep.subr.mxu0 0.0
    %51 = vmatpush1.msra.mxu0 0.0
    %52 = vmatprep.subr.mxu0 0.0
    %53 = vmatpush1.msra.mxu0 0.0
    %54 = vmatprep.subr.mxu0 0.0
    %55 = vmatpush1.msra.mxu0 0.0
    %56 = vmatprep.subr.mxu0 0.0
    %57 = vmatpush1.msra.mxu0 0.0
    %58 = vmatprep.subr.mxu0 0.0
    %59 = vmatpush1.msra.mxu0 0.0
    %60 = vmatprep.subr.mxu0 0.0
    %61 = vmatpush1.msra.mxu0 0.0
    %62 = vmatprep.subr.mxu0 0.0
    %63 = vmatpush1.msra.mxu0 0.0
    %64 = vmatprep.subr.mxu0 0.0
    %65 = vmatpush1.msra.mxu0 0.0
    %66 = vmatprep.subr.mxu0 0.0
    %67 = vmatpush1.msra.mxu0 0.0
    %68 = vmatprep.subr.mxu0 0.0
    %69 = vmatpush1.msra.mxu0 0.0
    %70 = vmatprep.subr.mxu0 0.0
    %71 = vmatpush1.msra.mxu0 0.0
    %72 = vmatprep.subr.mxu0 0.0
    %73 = vmatpush1.msra.mxu0 0.0
    %74 = vmatprep.subr.mxu0 0.0
    %75 = vmatpush1.msra.mxu0 0.0
    %76 = vmatprep.subr.mxu0 0.0
    %77 = vmatpush1.msra.mxu0 0.0
    %78 = vmatprep.subr.mxu0 0.0
    %79 = vmatpush1.msra.mxu0 0.0
    %80 = vmatprep.subr.mxu0 0.0
    %81 = vmatpush1.msra.mxu0 0.0
    %82 = vmatprep.subr.mxu0 0.0
    %83 = vmatpush1.msra.mxu0 0.0
    %84 = vmatprep.subr.mxu0 0.0
    %85 = vmatpush1.msra.mxu0 0.0
    %86 = vmatprep.subr.mxu0 0.0
    %87 = vmatpush1.msra.mxu0 0.0
    %88 = vmatprep.subr.mxu0 0.0
    %89 = vmatpush1.msra.mxu0 0.0
    %90 = vmatprep.subr.mxu0 0.0
    %91 = vmatpush1.msra.mxu0 0.0
    %92 = vmatprep.subr.mxu0 0.0
    %93 = vmatpush1.msra.mxu0 0.0
    %94 = vmatprep.subr.mxu0 0.0
    %95 = vmatpush1.msra.mxu0 0.0
    %96 = vmatprep.subr.mxu0 0.0
    %97 = vmatpush1.msra.mxu0 0.0
    %98 = vmatprep.subr.mxu0 0.0
    %99 = vmatpush1.msra.mxu0 0.0
    %100 = vmatprep.subr.mxu0 0.0
    %101 = vmatpush1.msra.mxu0 0.0
    %102 = vmatprep.mubr.f32.mxu0 0.0
    %103 = vmatmul.mubr.f32.gmra.mrb[0].mxu0 %v33
    %v104 = vpop.f32.mrb[0].mxu0
    %v105 = vadd.f32 %v30, %v104
    %v106 = vpop.f32.mrb[0].mxu0
    %107 = vmatprep.mubr.f32.mxu0 0.0
    %108 = vmatmul.mubr.f32.gmra.mrb[0].mxu0 %v36
    %v109 = vpop.f32.mrb[0].mxu0
    %v110 = vadd.f32 %v30, %v109
    %v111 = vpop.f32.mrb[0].mxu0
    %112 = vdwg.mxu0
    %v113 = vmax.f32 %v105, 0.0
    %v114 = vmax.f32 %v110, 0.0
    %v115 = vlaneseq
    %v116 = vshrl.u32 %v115, 7
    %v117 = vsub.s32 0, %v116
    %v118 = vrot.slane %v26, %v117
    %v120 = vsel %vm31, %v113, 0
    %v123 = vsel %vm31, %v114, 0
    %125 = vmatprep.subr.mxu0 0.0
    %126 = vmatpush1.msra.mxu0 %v21
    %127 = vmatprep.subr.mxu0 0.0
    %128 = vmatpush1.msra.mxu0 %v22
    %129 = vmatprep.subr.mxu0 0.0
    %130 = vmatpush1.msra.mxu0 %v23
    %131 = vmatprep.subr.mxu0 0.0
    %132 = vmatpush1.msra.mxu0 %v24
    %133 = vmatprep.subr.mxu0 0.0
    %134 = vmatpush1.msra.mxu0 0.0
    %135 = vmatprep.subr.mxu0 0.0
    %136 = vmatpush1.msra.mxu0 0.0
    %137 = vmatprep.subr.mxu0 0.0
    %138 = vmatpush1.msra.mxu0 0.0
    %139 = vmatprep.subr.mxu0 0.0
    %140 = vmatpush1.msra.mxu0 0.0
    %141 = vmatprep.subr.mxu0 0.0
    %142 = vmatpush1.msra.mxu0 0.0
    %143 = vmatprep.subr.mxu0 0.0
    %144 = vmatpush1.msra.mxu0 0.0
    %145 = vmatprep.subr.mxu0 0.0
    %146 = vmatpush1.msra.mxu0 0.0
    %147 = vmatprep.subr.mxu0 0.0
    %148 = vmatpush1.msra.mxu0 0.0
    %149 = vmatprep.subr.mxu0 0.0
    %150 = vmatpush1.msra.mxu0 0.0
    %151 = vmatprep.subr.mxu0 0.0
    %152 = vmatpush1.msra.mxu0 0.0
    %153 = vmatprep.subr.mxu0 0.0
    %154 = vmatpush1.msra.mxu0 0.0
    %155 = vmatprep.subr.mxu0 0.0
    %156 = vmatpush1.msra.mxu0 0.0
    %157 = vmatprep.subr.mxu0 0.0
    %158 = vmatpush1.msra.mxu0 0.0
    %159 = vmatprep.subr.mxu0 0.0
    %160 = vmatpush1.msra.mxu0 0.0
    %161 = vmatprep.subr.mxu0 0.0
    %162 = vmatpush1.msra.mxu0 0.0
    %163 = vmatprep.subr.mxu0 0.0
    %164 = vmatpush1.msra.mxu0 0.0
    %165 = vmatprep.subr.mxu0 0.0
    %166 = vmatpush1.msra.mxu0 0.0
    %167 = vmatprep.subr.mxu0 0.0
    %168 = vmatpush1.msra.mxu0 0.0
    %169 = vmatprep.subr.mxu0 0.0
    %170 = vmatpush1.msra.mxu0 0.0
    %171 = vmatprep.subr.mxu0 0.0
    %172 = vmatpush1.msra.mxu0 0.0
    %173 = vmatprep.subr.mxu0 0.0
    %174 = vmatpush1.msra.mxu0 0.0
    %175 = vmatprep.subr.mxu0 0.0
    %176 = vmatpush1.msra.mxu0 0.0
    %177 = vmatprep.subr.mxu0 0.0
    %178 = vmatpush1.msra.mxu0 0.0
    %179 = vmatprep.subr.mxu0 0.0
    %180 = vmatpush1.msra.mxu0 0.0
    %181 = vmatprep.subr.mxu0 0.0
    %182 = vmatpush1.msra.mxu0 0.0
    %183 = vmatprep.subr.mxu0 0.0
    %184 = vmatpush1.msra.mxu0 0.0
    %185 = vmatprep.subr.mxu0 0.0
    %186 = vmatpush1.msra.mxu0 0.0
    %187 = vmatprep.subr.mxu0 0.0
    %188 = vmatpush1.msra.mxu0 0.0
    %189 = vmatprep.mubr.f32.mxu0 0.0
    %190 = vmatmul.mubr.f32.gmra.mrb[0].mxu0 %v120
    %v191 = vpop.f32.mrb[0].mxu0
    %v192 = vadd.f32 %v118, %v191
    %v193 = vpop.f32.mrb[0].mxu0
    %194 = vmatprep.mubr.f32.mxu0 0.0
    %195 = vmatmul.mubr.f32.gmra.mrb[0].mxu0 %v123
    %v196 = vpop.f32.mrb[0].mxu0
    %v197 = vadd.f32 %v118, %v196
    %v198 = vpop.f32.mrb[0].mxu0
    %199 = vdwg.mxu0
    %v200 = vadd.f32 %v15, %v192
    %v201 = vadd.f32 %v16, %v197
    %202 = vst.msk [vmem:[#allocation2] sm:$0xff] %vm31, %v200
    %203 = vst.msk [vmem:[#allocation2 + $0x8] sm:$0xff] %vm31, %v201
    // Predicated region
    $region14: #{ffn_forward.1} parent=1 // pred_check
      _
    $region15: #{ffn_forward.1} parent=1 // pred_check_branch
      %205 = sbr.rel (0) target = $region17
    $region16: #{ffn_forward.1} parent=1 // pred_region
      %s207 = ssub.s32 256, 256
      %208 = vsyncadd [#allocation3], %s207
      %s209 = sshll.u32 [#allocation2], 4
      %s210 = int_to_ptr.vmem [resolvable:$true] %s209
      %215 = dma.vmem_to_hbm [thread:$0]  %s210, 256, %s3, [#allocation3], 128, 128, 8
    $region17: #{ffn_forward.1} parent=1 // pred_fallthru
      _
    // Predicated region
    $region18: #{ffn_forward.1} parent=1 // pred_check
      _
    $region19: #{ffn_forward.1} parent=1 // pred_check_branch
      %217 = sbr.rel (0) target = $region21
    $region20: #{ffn_forward.1} parent=1 // pred_region
      %218 = dma.done [#allocation3], 256
    $region21: #{ffn_forward.1} parent=1 // pred_fallthru
      _
    %219 = vsyncpa [#allocation3], 1

</llo_original>
